<compile_context>
chip_gen: v5e
topology: v5e:2x2
jax: 0.10.0
libtpu: 0.0.40
codegen_flags: <defaults>
</compile_context>

<pallas_src>
import jax
import jax.numpy as jnp
from jax import lax
from jax.experimental import pallas as pl
from jax.experimental.pallas import tpu as pltpu  # noqa: F401  (TPU backend)


def lstm_decoder_kernel(x_ref, wih_ref, whh_ref, b_ref, wfc_ref, bfc_ref,
                        out_ref):
    """x_ref: (T, B_pad, I) time-major; weights gate-concatenated on lanes."""
    T = x_ref.shape[0]
    B = x_ref.shape[1]
    H = whh_ref.shape[0]

    # Load weights / bias once; they stay vreg/VMEM-resident across all steps.
    wih = wih_ref[...]          # (I, 4H)
    whh = whh_ref[...]          # (H, 4H)
    bias = b_ref[...]           # (B, 4H) — pre-broadcast in the wrapper

    h0 = jnp.zeros((B, H), jnp.float32)
    c0 = jnp.zeros((B, H), jnp.float32)

    def step(t, carry):
        h, c = carry
        x_t = x_ref[t]          # (B, I) current timestep
        # Single fused, lane-dense gate matmul: (B, 4H)
        gates = (jnp.dot(x_t, wih, preferred_element_type=jnp.float32)
                 + jnp.dot(h, whh, preferred_element_type=jnp.float32)
                 + bias)
        i_g = jax.nn.sigmoid(gates[:, 0 * H:1 * H])
        f_g = jax.nn.sigmoid(gates[:, 1 * H:2 * H])
        g_g = jnp.tanh(gates[:, 2 * H:3 * H])
        o_g = jax.nn.sigmoid(gates[:, 3 * H:4 * H])
        c_new = f_g * c + i_g * g_g
        h_new = o_g * jnp.tanh(c_new)
        return (h_new, c_new)

    h_last, _ = lax.fori_loop(0, T, step, (h0, c0), unroll=True)

    # Lane-dense FC: wfc is (H, 128) zero-padded, output (B, 128) unmasked store.
    out_ref[...] = (jnp.dot(h_last, wfc_ref[...],
                            preferred_element_type=jnp.float32)
                    + bfc_ref[...])


def lstm_decoder(x, w_ih_cat, w_hh_cat, b_cat, w_fc_pad, b_fc_pad):
    """x: (B, T, I) float32, batch_first like the PyTorch module.

    w_ih_cat: (I, 4H), w_hh_cat: (H, 4H), b_cat: (1, 4H) — gate order i,f,g,o.
    w_fc_pad: (H, 128) with fc weight in column 0; b_fc_pad: (1, 128).
    Returns (B, 1).
    """
    B, T, I = x.shape
    H = w_hh_cat.shape[0]
    OUT_LANES = w_fc_pad.shape[1]

    # Pad batch to the sublane width (multiple of 8).
    B_pad = max(8, ((B + 7) // 8) * 8)
    x_p = jnp.zeros((B_pad, T, I), x.dtype).at[:B].set(x)
    x_tmajor = jnp.transpose(x_p, (1, 0, 2))                 # (T, B_pad, I)

    # Pre-broadcast biases once in the wrapper (no in-loop broadcast_in_dim).
    b_bcast = jnp.broadcast_to(b_cat, (B_pad, 4 * H))
    b_fc_bcast = jnp.broadcast_to(b_fc_pad, (B_pad, OUT_LANES))

    out_padded = pl.pallas_call(
        lstm_decoder_kernel,
        out_shape=jax.ShapeDtypeStruct((B_pad, OUT_LANES), jnp.float32),
    )(x_tmajor, w_ih_cat, w_hh_cat, b_bcast, w_fc_pad, b_fc_bcast)

    return out_padded[:B, :1]


def reference_lstm_decoder(x, weight_ih, weight_hh, bias_ih, bias_hh,
                           fc_weight, fc_bias):
    """Pure-JAX reference matching PyTorch nn.LSTM (gate order i,f,g,o)."""
    B, T, I = x.shape
    H = weight_hh.shape[1]

    def step(carry, x_t):
        h, c = carry
        gates = x_t @ weight_ih.T + bias_ih + h @ weight_hh.T + bias_hh
        i = jax.nn.sigmoid(gates[:, 0 * H:1 * H])
        f = jax.nn.sigmoid(gates[:, 1 * H:2 * H])
        g = jnp.tanh(gates[:, 2 * H:3 * H])
        o = jax.nn.sigmoid(gates[:, 3 * H:4 * H])
        c_new = f * c + i * g
        h_new = o * jnp.tanh(c_new)
        return (h_new, c_new), None

    h0 = jnp.zeros((B, H), jnp.float32)
    c0 = jnp.zeros((B, H), jnp.float32)
    (h_last, _), _ = lax.scan(step, (h0, c0), jnp.transpose(x, (1, 0, 2)))
    return h_last @ fc_weight.T + fc_bias


if __name__ == "__main__":
    # Small shapes consistent with the module's forward: (batch, seq, input_size)
    B, T, I, H = 2, 8, 16, 32
    key = jax.random.PRNGKey(0)
    ks = jax.random.split(key, 8)
    bound = 1.0 / jnp.sqrt(H)

    # PyTorch-shaped parameters (deterministic synthetic init).
    weight_ih = jax.random.uniform(ks[0], (4 * H, I), jnp.float32, -bound, bound)
    weight_hh = jax.random.uniform(ks[1], (4 * H, H), jnp.float32, -bound, bound)
    bias_ih = jax.random.uniform(ks[2], (4 * H,), jnp.float32, -bound, bound)
    bias_hh = jax.random.uniform(ks[3], (4 * H,), jnp.float32, -bound, bound)
    fc_weight = jax.random.uniform(ks[4], (1, H), jnp.float32, -bound, bound)
    fc_bias = jax.random.uniform(ks[5], (1,), jnp.float32, -bound, bound)

    x = jax.random.normal(ks[6], (B, T, I), jnp.float32)

    # Repack for the kernel:
    #   gates concatenated on the lane axis -> x @ W gives (B, 4H) directly.
    w_ih_cat = weight_ih.T                                   # (I, 4H)
    w_hh_cat = weight_hh.T                                   # (H, 4H)
    b_cat = (bias_ih + bias_hh).reshape(1, 4 * H)            # (1, 4H)
    #   lane-dense FC: pad the (H, 1) weight to (H, 128), column 0 is real.
    w_fc_pad = jnp.zeros((H, 128), jnp.float32).at[:, 0].set(fc_weight[0])
    b_fc_pad = jnp.zeros((1, 128), jnp.float32).at[0, 0].set(fc_bias[0])

    out = lstm_decoder(x, w_ih_cat, w_hh_cat, b_cat, w_fc_pad, b_fc_pad)
    out = jax.block_until_ready(out)

    ref = reference_lstm_decoder(x, weight_ih, weight_hh, bias_ih, bias_hh,
                                 fc_weight, fc_bias)
    ref = jax.block_until_ready(ref)

    assert out.shape == (B, 1), out.shape
    assert jnp.allclose(out, ref, atol=1e-5, rtol=1e-5), (out, ref)
    print("KERNEL_OK")
</pallas_src>

<mosaic_0001>
module attributes {stable_mosaic.version = 11 : i64} {
  func.func @lstm_decoder_kernel(%arg0: memref<8x8x16xf32, #tpu.memory_space<vmem>>, %arg1: memref<16x128xf32, #tpu.memory_space<vmem>>, %arg2: memref<32x128xf32, #tpu.memory_space<vmem>>, %arg3: memref<8x128xf32, #tpu.memory_space<vmem>>, %arg4: memref<32x128xf32, #tpu.memory_space<vmem>>, %arg5: memref<8x128xf32, #tpu.memory_space<vmem>>, %arg6: memref<8x128xf32, #tpu.memory_space<vmem>>) attributes {dimension_semantics = [], scalar_prefetch = 0 : i64, scratch_operands = 0 : i64, tpu.core_type = #tpu.core_type<tc>} {
    %c0 = arith.constant 0 : index
    %c0_0 = arith.constant 0 : index
    %0 = vector.load %arg1[%c0, %c0_0] : memref<16x128xf32, #tpu.memory_space<vmem>>, vector<16x128xf32>
    %c0_1 = arith.constant 0 : index
    %c0_2 = arith.constant 0 : index
    %1 = vector.load %arg2[%c0_1, %c0_2] : memref<32x128xf32, #tpu.memory_space<vmem>>, vector<32x128xf32>
    %c0_3 = arith.constant 0 : index
    %c0_4 = arith.constant 0 : index
    %2 = vector.load %arg3[%c0_3, %c0_4] : memref<8x128xf32, #tpu.memory_space<vmem>>, vector<8x128xf32>
    %cst = arith.constant 0.000000e+00 : f32
    %3 = vector.broadcast %cst : f32 to vector<8x32xf32>
    %cst_5 = arith.constant 0.000000e+00 : f32
    %4 = vector.broadcast %cst_5 : f32 to vector<8x32xf32>
    %c0_i32 = arith.constant 0 : i32
    %5 = arith.index_cast %c0_i32 : i32 to index
    %c0_6 = arith.constant 0 : index
    %c0_7 = arith.constant 0 : index
    %6 = vector.load %arg0[%5, %c0_6, %c0_7] : memref<8x8x16xf32, #tpu.memory_space<vmem>>, vector<1x8x16xf32>
    %7 = vector.shape_cast %6 : vector<1x8x16xf32> to vector<8x16xf32>
    %cst_8 = arith.constant dense<0.000000e+00> : vector<8x128xf32>
    %8 = tpu.matmul %7, %0, %cst_8 {dimension_numbers = #tpu.dot_dimension_numbers<[1], [0], [0], [1], [0, 0, 1, 1], [], []>} : vector<8x16xf32>, vector<16x128xf32>, vector<8x128xf32> -> vector<8x128xf32>
    %cst_9 = arith.constant dense<0.000000e+00> : vector<8x128xf32>
    %9 = tpu.matmul %3, %1, %cst_9 {dimension_numbers = #tpu.dot_dimension_numbers<[1], [0], [0], [1], [0, 0, 1, 1], [], []>} : vector<8x32xf32>, vector<32x128xf32>, vector<8x128xf32> -> vector<8x128xf32>
    %10 = arith.addf %8, %9 : vector<8x128xf32>
    %11 = arith.addf %10, %2 : vector<8x128xf32>
    %12 = vector.extract_strided_slice %11 {offsets = [0, 0], sizes = [8, 32], strides = [1, 1]} : vector<8x128xf32> to vector<8x32xf32>
    %13 = arith.negf %12 : vector<8x32xf32>
    %14 = math.exp %13 : vector<8x32xf32>
    %cst_10 = arith.constant 1.000000e+00 : f32
    %15 = vector.broadcast %cst_10 : f32 to vector<8x32xf32>
    %16 = arith.addf %15, %14 : vector<8x32xf32>
    %17 = arith.divf %15, %16 : vector<8x32xf32>
    %18 = vector.extract_strided_slice %11 {offsets = [0, 32], sizes = [8, 32], strides = [1, 1]} : vector<8x128xf32> to vector<8x32xf32>
    %19 = arith.negf %18 : vector<8x32xf32>
    %20 = math.exp %19 : vector<8x32xf32>
    %cst_11 = arith.constant 1.000000e+00 : f32
    %21 = vector.broadcast %cst_11 : f32 to vector<8x32xf32>
    %22 = arith.addf %21, %20 : vector<8x32xf32>
    %23 = arith.divf %21, %22 : vector<8x32xf32>
    %24 = vector.extract_strided_slice %11 {offsets = [0, 64], sizes = [8, 32], strides = [1, 1]} : vector<8x128xf32> to vector<8x32xf32>
    %25 = math.tanh %24 : vector<8x32xf32>
    %26 = vector.extract_strided_slice %11 {offsets = [0, 96], sizes = [8, 32], strides = [1, 1]} : vector<8x128xf32> to vector<8x32xf32>
    %27 = arith.negf %26 : vector<8x32xf32>
    %28 = math.exp %27 : vector<8x32xf32>
    %cst_12 = arith.constant 1.000000e+00 : f32
    %29 = vector.broadcast %cst_12 : f32 to vector<8x32xf32>
    %30 = arith.addf %29, %28 : vector<8x32xf32>
    %31 = arith.divf %29, %30 : vector<8x32xf32>
    %32 = arith.mulf %23, %4 : vector<8x32xf32>
    %33 = arith.mulf %17, %25 : vector<8x32xf32>
    %34 = arith.addf %32, %33 : vector<8x32xf32>
    %35 = math.tanh %34 : vector<8x32xf32>
    %36 = arith.mulf %31, %35 : vector<8x32xf32>
    %c1_i32 = arith.constant 1 : i32
    %37 = arith.index_cast %c1_i32 : i32 to index
    %c0_13 = arith.constant 0 : index
    %c0_14 = arith.constant 0 : index
    %38 = vector.load %arg0[%37, %c0_13, %c0_14] : memref<8x8x16xf32, #tpu.memory_space<vmem>>, vector<1x8x16xf32>
    %39 = vector.shape_cast %38 : vector<1x8x16xf32> to vector<8x16xf32>
    %cst_15 = arith.constant dense<0.000000e+00> : vector<8x128xf32>
    %40 = tpu.matmul %39, %0, %cst_15 {dimension_numbers = #tpu.dot_dimension_numbers<[1], [0], [0], [1], [0, 0, 1, 1], [], []>} : vector<8x16xf32>, vector<16x128xf32>, vector<8x128xf32> -> vector<8x128xf32>
    %cst_16 = arith.constant dense<0.000000e+00> : vector<8x128xf32>
    %41 = tpu.matmul %36, %1, %cst_16 {dimension_numbers = #tpu.dot_dimension_numbers<[1], [0], [0], [1], [0, 0, 1, 1], [], []>} : vector<8x32xf32>, vector<32x128xf32>, vector<8x128xf32> -> vector<8x128xf32>
    %42 = arith.addf %40, %41 : vector<8x128xf32>
    %43 = arith.addf %42, %2 : vector<8x128xf32>
    %44 = vector.extract_strided_slice %43 {offsets = [0, 0], sizes = [8, 32], strides = [1, 1]} : vector<8x128xf32> to vector<8x32xf32>
    %45 = arith.negf %44 : vector<8x32xf32>
    %46 = math.exp %45 : vector<8x32xf32>
    %cst_17 = arith.constant 1.000000e+00 : f32
    %47 = vector.broadcast %cst_17 : f32 to vector<8x32xf32>
    %48 = arith.addf %47, %46 : vector<8x32xf32>
    %49 = arith.divf %47, %48 : vector<8x32xf32>
    %50 = vector.extract_strided_slice %43 {offsets = [0, 32], sizes = [8, 32], strides = [1, 1]} : vector<8x128xf32> to vector<8x32xf32>
    %51 = arith.negf %50 : vector<8x32xf32>
    %52 = math.exp %51 : vector<8x32xf32>
    %cst_18 = arith.constant 1.000000e+00 : f32
    %53 = vector.broadcast %cst_18 : f32 to vector<8x32xf32>
    %54 = arith.addf %53, %52 : vector<8x32xf32>
    %55 = arith.divf %53, %54 : vector<8x32xf32>
    %56 = vector.extract_strided_slice %43 {offsets = [0, 64], sizes = [8, 32], strides = [1, 1]} : vector<8x128xf32> to vector<8x32xf32>
    %57 = math.tanh %56 : vector<8x32xf32>
    %58 = vector.extract_strided_slice %43 {offsets = [0, 96], sizes = [8, 32], strides = [1, 1]} : vector<8x128xf32> to vector<8x32xf32>
    %59 = arith.negf %58 : vector<8x32xf32>
    %60 = math.exp %59 : vector<8x32xf32>
    %cst_19 = arith.constant 1.000000e+00 : f32
    %61 = vector.broadcast %cst_19 : f32 to vector<8x32xf32>
    %62 = arith.addf %61, %60 : vector<8x32xf32>
    %63 = arith.divf %61, %62 : vector<8x32xf32>
    %64 = arith.mulf %55, %34 : vector<8x32xf32>
    %65 = arith.mulf %49, %57 : vector<8x32xf32>
    %66 = arith.addf %64, %65 : vector<8x32xf32>
    %67 = math.tanh %66 : vector<8x32xf32>
    %68 = arith.mulf %63, %67 : vector<8x32xf32>
    %c2_i32 = arith.constant 2 : i32
    %69 = arith.index_cast %c2_i32 : i32 to index
    %c0_20 = arith.constant 0 : index
    %c0_21 = arith.constant 0 : index
    %70 = vector.load %arg0[%69, %c0_20, %c0_21] : memref<8x8x16xf32, #tpu.memory_space<vmem>>, vector<1x8x16xf32>
    %71 = vector.shape_cast %70 : vector<1x8x16xf32> to vector<8x16xf32>
    %cst_22 = arith.constant dense<0.000000e+00> : vector<8x128xf32>
    %72 = tpu.matmul %71, %0, %cst_22 {dimension_numbers = #tpu.dot_dimension_numbers<[1], [0], [0], [1], [0, 0, 1, 1], [], []>} : vector<8x16xf32>, vector<16x128xf32>, vector<8x128xf32> -> vector<8x128xf32>
    %cst_23 = arith.constant dense<0.000000e+00> : vector<8x128xf32>
    %73 = tpu.matmul %68, %1, %cst_23 {dimension_numbers = #tpu.dot_dimension_numbers<[1], [0], [0], [1], [0, 0, 1, 1], [], []>} : vector<8x32xf32>, vector<32x128xf32>, vector<8x128xf32> -> vector<8x128xf32>
    %74 = arith.addf %72, %73 : vector<8x128xf32>
    %75 = arith.addf %74, %2 : vector<8x128xf32>
    %76 = vector.extract_strided_slice %75 {offsets = [0, 0], sizes = [8, 32], strides = [1, 1]} : vector<8x128xf32> to vector<8x32xf32>
    %77 = arith.negf %76 : vector<8x32xf32>
    %78 = math.exp %77 : vector<8x32xf32>
    %cst_24 = arith.constant 1.000000e+00 : f32
    %79 = vector.broadcast %cst_24 : f32 to vector<8x32xf32>
    %80 = arith.addf %79, %78 : vector<8x32xf32>
    %81 = arith.divf %79, %80 : vector<8x32xf32>
    %82 = vector.extract_strided_slice %75 {offsets = [0, 32], sizes = [8, 32], strides = [1, 1]} : vector<8x128xf32> to vector<8x32xf32>
    %83 = arith.negf %82 : vector<8x32xf32>
    %84 = math.exp %83 : vector<8x32xf32>
    %cst_25 = arith.constant 1.000000e+00 : f32
    %85 = vector.broadcast %cst_25 : f32 to vector<8x32xf32>
    %86 = arith.addf %85, %84 : vector<8x32xf32>
    %87 = arith.divf %85, %86 : vector<8x32xf32>
    %88 = vector.extract_strided_slice %75 {offsets = [0, 64], sizes = [8, 32], strides = [1, 1]} : vector<8x128xf32> to vector<8x32xf32>
    %89 = math.tanh %88 : vector<8x32xf32>
    %90 = vector.extract_strided_slice %75 {offsets = [0, 96], sizes = [8, 32], strides = [1, 1]} : vector<8x128xf32> to vector<8x32xf32>
    %91 = arith.negf %90 : vector<8x32xf32>
    %92 = math.exp %91 : vector<8x32xf32>
    %cst_26 = arith.constant 1.000000e+00 : f32
    %93 = vector.broadcast %cst_26 : f32 to vector<8x32xf32>
    %94 = arith.addf %93, %92 : vector<8x32xf32>
    %95 = arith.divf %93, %94 : vector<8x32xf32>
    %96 = arith.mulf %87, %66 : vector<8x32xf32>
    %97 = arith.mulf %81, %89 : vector<8x32xf32>
    %98 = arith.addf %96, %97 : vector<8x32xf32>
    %99 = math.tanh %98 : vector<8x32xf32>
    %100 = arith.mulf %95, %99 : vector<8x32xf32>
    %c3_i32 = arith.constant 3 : i32
    %101 = arith.index_cast %c3_i32 : i32 to index
    %c0_27 = arith.constant 0 : index
    %c0_28 = arith.constant 0 : index
    %102 = vector.load %arg0[%101, %c0_27, %c0_28] : memref<8x8x16xf32, #tpu.memory_space<vmem>>, vector<1x8x16xf32>
    %103 = vector.shape_cast %102 : vector<1x8x16xf32> to vector<8x16xf32>
    %cst_29 = arith.constant dense<0.000000e+00> : vector<8x128xf32>
    %104 = tpu.matmul %103, %0, %cst_29 {dimension_numbers = #tpu.dot_dimension_numbers<[1], [0], [0], [1], [0, 0, 1, 1], [], []>} : vector<8x16xf32>, vector<16x128xf32>, vector<8x128xf32> -> vector<8x128xf32>
    %cst_30 = arith.constant dense<0.000000e+00> : vector<8x128xf32>
    %105 = tpu.matmul %100, %1, %cst_30 {dimension_numbers = #tpu.dot_dimension_numbers<[1], [0], [0], [1], [0, 0, 1, 1], [], []>} : vector<8x32xf32>, vector<32x128xf32>, vector<8x128xf32> -> vector<8x128xf32>
    %106 = arith.addf %104, %105 : vector<8x128xf32>
    %107 = arith.addf %106, %2 : vector<8x128xf32>
    %108 = vector.extract_strided_slice %107 {offsets = [0, 0], sizes = [8, 32], strides = [1, 1]} : vector<8x128xf32> to vector<8x32xf32>
    %109 = arith.negf %108 : vector<8x32xf32>
    %110 = math.exp %109 : vector<8x32xf32>
    %cst_31 = arith.constant 1.000000e+00 : f32
    %111 = vector.broadcast %cst_31 : f32 to vector<8x32xf32>
    %112 = arith.addf %111, %110 : vector<8x32xf32>
    %113 = arith.divf %111, %112 : vector<8x32xf32>
    %114 = vector.extract_strided_slice %107 {offsets = [0, 32], sizes = [8, 32], strides = [1, 1]} : vector<8x128xf32> to vector<8x32xf32>
    %115 = arith.negf %114 : vector<8x32xf32>
    %116 = math.exp %115 : vector<8x32xf32>
    %cst_32 = arith.constant 1.000000e+00 : f32
    %117 = vector.broadcast %cst_32 : f32 to vector<8x32xf32>
    %118 = arith.addf %117, %116 : vector<8x32xf32>
    %119 = arith.divf %117, %118 : vector<8x32xf32>
    %120 = vector.extract_strided_slice %107 {offsets = [0, 64], sizes = [8, 32], strides = [1, 1]} : vector<8x128xf32> to vector<8x32xf32>
    %121 = math.tanh %120 : vector<8x32xf32>
    %122 = vector.extract_strided_slice %107 {offsets = [0, 96], sizes = [8, 32], strides = [1, 1]} : vector<8x128xf32> to vector<8x32xf32>
    %123 = arith.negf %122 : vector<8x32xf32>
    %124 = math.exp %123 : vector<8x32xf32>
    %cst_33 = arith.constant 1.000000e+00 : f32
    %125 = vector.broadcast %cst_33 : f32 to vector<8x32xf32>
    %126 = arith.addf %125, %124 : vector<8x32xf32>
    %127 = arith.divf %125, %126 : vector<8x32xf32>
    %128 = arith.mulf %119, %98 : vector<8x32xf32>
    %129 = arith.mulf %113, %121 : vector<8x32xf32>
    %130 = arith.addf %128, %129 : vector<8x32xf32>
    %131 = math.tanh %130 : vector<8x32xf32>
    %132 = arith.mulf %127, %131 : vector<8x32xf32>
    %c4_i32 = arith.constant 4 : i32
    %133 = arith.index_cast %c4_i32 : i32 to index
    %c0_34 = arith.constant 0 : index
    %c0_35 = arith.constant 0 : index
    %134 = vector.load %arg0[%133, %c0_34, %c0_35] : memref<8x8x16xf32, #tpu.memory_space<vmem>>, vector<1x8x16xf32>
    %135 = vector.shape_cast %134 : vector<1x8x16xf32> to vector<8x16xf32>
    %cst_36 = arith.constant dense<0.000000e+00> : vector<8x128xf32>
    %136 = tpu.matmul %135, %0, %cst_36 {dimension_numbers = #tpu.dot_dimension_numbers<[1], [0], [0], [1], [0, 0, 1, 1], [], []>} : vector<8x16xf32>, vector<16x128xf32>, vector<8x128xf32> -> vector<8x128xf32>
    %cst_37 = arith.constant dense<0.000000e+00> : vector<8x128xf32>
    %137 = tpu.matmul %132, %1, %cst_37 {dimension_numbers = #tpu.dot_dimension_numbers<[1], [0], [0], [1], [0, 0, 1, 1], [], []>} : vector<8x32xf32>, vector<32x128xf32>, vector<8x128xf32> -> vector<8x128xf32>
    %138 = arith.addf %136, %137 : vector<8x128xf32>
    %139 = arith.addf %138, %2 : vector<8x128xf32>
    %140 = vector.extract_strided_slice %139 {offsets = [0, 0], sizes = [8, 32], strides = [1, 1]} : vector<8x128xf32> to vector<8x32xf32>
    %141 = arith.negf %140 : vector<8x32xf32>
    %142 = math.exp %141 : vector<8x32xf32>
    %cst_38 = arith.constant 1.000000e+00 : f32
    %143 = vector.broadcast %cst_38 : f32 to vector<8x32xf32>
    %144 = arith.addf %143, %142 : vector<8x32xf32>
    %145 = arith.divf %143, %144 : vector<8x32xf32>
    %146 = vector.extract_strided_slice %139 {offsets = [0, 32], sizes = [8, 32], strides = [1, 1]} : vector<8x128xf32> to vector<8x32xf32>
    %147 = arith.negf %146 : vector<8x32xf32>
    %148 = math.exp %147 : vector<8x32xf32>
    %cst_39 = arith.constant 1.000000e+00 : f32
    %149 = vector.broadcast %cst_39 : f32 to vector<8x32xf32>
    %150 = arith.addf %149, %148 : vector<8x32xf32>
    %151 = arith.divf %149, %150 : vector<8x32xf32>
    %152 = vector.extract_strided_slice %139 {offsets = [0, 64], sizes = [8, 32], strides = [1, 1]} : vector<8x128xf32> to vector<8x32xf32>
    %153 = math.tanh %152 : vector<8x32xf32>
    %154 = vector.extract_strided_slice %139 {offsets = [0, 96], sizes = [8, 32], strides = [1, 1]} : vector<8x128xf32> to vector<8x32xf32>
    %155 = arith.negf %154 : vector<8x32xf32>
    %156 = math.exp %155 : vector<8x32xf32>
    %cst_40 = arith.constant 1.000000e+00 : f32
    %157 = vector.broadcast %cst_40 : f32 to vector<8x32xf32>
    %158 = arith.addf %157, %156 : vector<8x32xf32>
    %159 = arith.divf %157, %158 : vector<8x32xf32>
    %160 = arith.mulf %151, %130 : vector<8x32xf32>
    %161 = arith.mulf %145, %153 : vector<8x32xf32>
    %162 = arith.addf %160, %161 : vector<8x32xf32>
    %163 = math.tanh %162 : vector<8x32xf32>
    %164 = arith.mulf %159, %163 : vector<8x32xf32>
    %c5_i32 = arith.constant 5 : i32
    %165 = arith.index_cast %c5_i32 : i32 to index
    %c0_41 = arith.constant 0 : index
    %c0_42 = arith.constant 0 : index
    %166 = vector.load %arg0[%165, %c0_41, %c0_42] : memref<8x8x16xf32, #tpu.memory_space<vmem>>, vector<1x8x16xf32>
    %167 = vector.shape_cast %166 : vector<1x8x16xf32> to vector<8x16xf32>
    %cst_43 = arith.constant dense<0.000000e+00> : vector<8x128xf32>
    %168 = tpu.matmul %167, %0, %cst_43 {dimension_numbers = #tpu.dot_dimension_numbers<[1], [0], [0], [1], [0, 0, 1, 1], [], []>} : vector<8x16xf32>, vector<16x128xf32>, vector<8x128xf32> -> vector<8x128xf32>
    %cst_44 = arith.constant dense<0.000000e+00> : vector<8x128xf32>
    %169 = tpu.matmul %164, %1, %cst_44 {dimension_numbers = #tpu.dot_dimension_numbers<[1], [0], [0], [1], [0, 0, 1, 1], [], []>} : vector<8x32xf32>, vector<32x128xf32>, vector<8x128xf32> -> vector<8x128xf32>
    %170 = arith.addf %168, %169 : vector<8x128xf32>
    %171 = arith.addf %170, %2 : vector<8x128xf32>
    %172 = vector.extract_strided_slice %171 {offsets = [0, 0], sizes = [8, 32], strides = [1, 1]} : vector<8x128xf32> to vector<8x32xf32>
    %173 = arith.negf %172 : vector<8x32xf32>
    %174 = math.exp %173 : vector<8x32xf32>
    %cst_45 = arith.constant 1.000000e+00 : f32
    %175 = vector.broadcast %cst_45 : f32 to vector<8x32xf32>
    %176 = arith.addf %175, %174 : vector<8x32xf32>
    %177 = arith.divf %175, %176 : vector<8x32xf32>
    %178 = vector.extract_strided_slice %171 {offsets = [0, 32], sizes = [8, 32], strides = [1, 1]} : vector<8x128xf32> to vector<8x32xf32>
    %179 = arith.negf %178 : vector<8x32xf32>
    %180 = math.exp %179 : vector<8x32xf32>
    %cst_46 = arith.constant 1.000000e+00 : f32
    %181 = vector.broadcast %cst_46 : f32 to vector<8x32xf32>
    %182 = arith.addf %181, %180 : vector<8x32xf32>
    %183 = arith.divf %181, %182 : vector<8x32xf32>
    %184 = vector.extract_strided_slice %171 {offsets = [0, 64], sizes = [8, 32], strides = [1, 1]} : vector<8x128xf32> to vector<8x32xf32>
    %185 = math.tanh %184 : vector<8x32xf32>
    %186 = vector.extract_strided_slice %171 {offsets = [0, 96], sizes = [8, 32], strides = [1, 1]} : vector<8x128xf32> to vector<8x32xf32>
    %187 = arith.negf %186 : vector<8x32xf32>
    %188 = math.exp %187 : vector<8x32xf32>
    %cst_47 = arith.constant 1.000000e+00 : f32
    %189 = vector.broadcast %cst_47 : f32 to vector<8x32xf32>
    %190 = arith.addf %189, %188 : vector<8x32xf32>
    %191 = arith.divf %189, %190 : vector<8x32xf32>
    %192 = arith.mulf %183, %162 : vector<8x32xf32>
    %193 = arith.mulf %177, %185 : vector<8x32xf32>
    %194 = arith.addf %192, %193 : vector<8x32xf32>
    %195 = math.tanh %194 : vector<8x32xf32>
    %196 = arith.mulf %191, %195 : vector<8x32xf32>
    %c6_i32 = arith.constant 6 : i32
    %197 = arith.index_cast %c6_i32 : i32 to index
    %c0_48 = arith.constant 0 : index
    %c0_49 = arith.constant 0 : index
    %198 = vector.load %arg0[%197, %c0_48, %c0_49] : memref<8x8x16xf32, #tpu.memory_space<vmem>>, vector<1x8x16xf32>
    %199 = vector.shape_cast %198 : vector<1x8x16xf32> to vector<8x16xf32>
    %cst_50 = arith.constant dense<0.000000e+00> : vector<8x128xf32>
    %200 = tpu.matmul %199, %0, %cst_50 {dimension_numbers = #tpu.dot_dimension_numbers<[1], [0], [0], [1], [0, 0, 1, 1], [], []>} : vector<8x16xf32>, vector<16x128xf32>, vector<8x128xf32> -> vector<8x128xf32>
    %cst_51 = arith.constant dense<0.000000e+00> : vector<8x128xf32>
    %201 = tpu.matmul %196, %1, %cst_51 {dimension_numbers = #tpu.dot_dimension_numbers<[1], [0], [0], [1], [0, 0, 1, 1], [], []>} : vector<8x32xf32>, vector<32x128xf32>, vector<8x128xf32> -> vector<8x128xf32>
    %202 = arith.addf %200, %201 : vector<8x128xf32>
    %203 = arith.addf %202, %2 : vector<8x128xf32>
    %204 = vector.extract_strided_slice %203 {offsets = [0, 0], sizes = [8, 32], strides = [1, 1]} : vector<8x128xf32> to vector<8x32xf32>
    %205 = arith.negf %204 : vector<8x32xf32>
    %206 = math.exp %205 : vector<8x32xf32>
    %cst_52 = arith.constant 1.000000e+00 : f32
    %207 = vector.broadcast %cst_52 : f32 to vector<8x32xf32>
    %208 = arith.addf %207, %206 : vector<8x32xf32>
    %209 = arith.divf %207, %208 : vector<8x32xf32>
    %210 = vector.extract_strided_slice %203 {offsets = [0, 32], sizes = [8, 32], strides = [1, 1]} : vector<8x128xf32> to vector<8x32xf32>
    %211 = arith.negf %210 : vector<8x32xf32>
    %212 = math.exp %211 : vector<8x32xf32>
    %cst_53 = arith.constant 1.000000e+00 : f32
    %213 = vector.broadcast %cst_53 : f32 to vector<8x32xf32>
    %214 = arith.addf %213, %212 : vector<8x32xf32>
    %215 = arith.divf %213, %214 : vector<8x32xf32>
    %216 = vector.extract_strided_slice %203 {offsets = [0, 64], sizes = [8, 32], strides = [1, 1]} : vector<8x128xf32> to vector<8x32xf32>
    %217 = math.tanh %216 : vector<8x32xf32>
    %218 = vector.extract_strided_slice %203 {offsets = [0, 96], sizes = [8, 32], strides = [1, 1]} : vector<8x128xf32> to vector<8x32xf32>
    %219 = arith.negf %218 : vector<8x32xf32>
    %220 = math.exp %219 : vector<8x32xf32>
    %cst_54 = arith.constant 1.000000e+00 : f32
    %221 = vector.broadcast %cst_54 : f32 to vector<8x32xf32>
    %222 = arith.addf %221, %220 : vector<8x32xf32>
    %223 = arith.divf %221, %222 : vector<8x32xf32>
    %224 = arith.mulf %215, %194 : vector<8x32xf32>
    %225 = arith.mulf %209, %217 : vector<8x32xf32>
    %226 = arith.addf %224, %225 : vector<8x32xf32>
    %227 = math.tanh %226 : vector<8x32xf32>
    %228 = arith.mulf %223, %227 : vector<8x32xf32>
    %c7_i32 = arith.constant 7 : i32
    %229 = arith.index_cast %c7_i32 : i32 to index
    %c0_55 = arith.constant 0 : index
    %c0_56 = arith.constant 0 : index
    %230 = vector.load %arg0[%229, %c0_55, %c0_56] : memref<8x8x16xf32, #tpu.memory_space<vmem>>, vector<1x8x16xf32>
    %231 = vector.shape_cast %230 : vector<1x8x16xf32> to vector<8x16xf32>
    %cst_57 = arith.constant dense<0.000000e+00> : vector<8x128xf32>
    %232 = tpu.matmul %231, %0, %cst_57 {dimension_numbers = #tpu.dot_dimension_numbers<[1], [0], [0], [1], [0, 0, 1, 1], [], []>} : vector<8x16xf32>, vector<16x128xf32>, vector<8x128xf32> -> vector<8x128xf32>
    %cst_58 = arith.constant dense<0.000000e+00> : vector<8x128xf32>
    %233 = tpu.matmul %228, %1, %cst_58 {dimension_numbers = #tpu.dot_dimension_numbers<[1], [0], [0], [1], [0, 0, 1, 1], [], []>} : vector<8x32xf32>, vector<32x128xf32>, vector<8x128xf32> -> vector<8x128xf32>
    %234 = arith.addf %232, %233 : vector<8x128xf32>
    %235 = arith.addf %234, %2 : vector<8x128xf32>
    %236 = vector.extract_strided_slice %235 {offsets = [0, 0], sizes = [8, 32], strides = [1, 1]} : vector<8x128xf32> to vector<8x32xf32>
    %237 = arith.negf %236 : vector<8x32xf32>
    %238 = math.exp %237 : vector<8x32xf32>
    %cst_59 = arith.constant 1.000000e+00 : f32
    %239 = vector.broadcast %cst_59 : f32 to vector<8x32xf32>
    %240 = arith.addf %239, %238 : vector<8x32xf32>
    %241 = arith.divf %239, %240 : vector<8x32xf32>
    %242 = vector.extract_strided_slice %235 {offsets = [0, 32], sizes = [8, 32], strides = [1, 1]} : vector<8x128xf32> to vector<8x32xf32>
    %243 = arith.negf %242 : vector<8x32xf32>
    %244 = math.exp %243 : vector<8x32xf32>
    %cst_60 = arith.constant 1.000000e+00 : f32
    %245 = vector.broadcast %cst_60 : f32 to vector<8x32xf32>
    %246 = arith.addf %245, %244 : vector<8x32xf32>
    %247 = arith.divf %245, %246 : vector<8x32xf32>
    %248 = vector.extract_strided_slice %235 {offsets = [0, 64], sizes = [8, 32], strides = [1, 1]} : vector<8x128xf32> to vector<8x32xf32>
    %249 = math.tanh %248 : vector<8x32xf32>
    %250 = vector.extract_strided_slice %235 {offsets = [0, 96], sizes = [8, 32], strides = [1, 1]} : vector<8x128xf32> to vector<8x32xf32>
    %251 = arith.negf %250 : vector<8x32xf32>
    %252 = math.exp %251 : vector<8x32xf32>
    %cst_61 = arith.constant 1.000000e+00 : f32
    %253 = vector.broadcast %cst_61 : f32 to vector<8x32xf32>
    %254 = arith.addf %253, %252 : vector<8x32xf32>
    %255 = arith.divf %253, %254 : vector<8x32xf32>
    %256 = arith.mulf %247, %226 : vector<8x32xf32>
    %257 = arith.mulf %241, %249 : vector<8x32xf32>
    %258 = arith.addf %256, %257 : vector<8x32xf32>
    %259 = math.tanh %258 : vector<8x32xf32>
    %260 = arith.mulf %255, %259 : vector<8x32xf32>
    %c8_i32 = arith.constant 8 : i32
    %c0_62 = arith.constant 0 : index
    %c0_63 = arith.constant 0 : index
    %261 = vector.load %arg4[%c0_62, %c0_63] : memref<32x128xf32, #tpu.memory_space<vmem>>, vector<32x128xf32>
    %cst_64 = arith.constant dense<0.000000e+00> : vector<8x128xf32>
    %262 = tpu.matmul %260, %261, %cst_64 {dimension_numbers = #tpu.dot_dimension_numbers<[1], [0], [0], [1], [0, 0, 1, 1], [], []>} : vector<8x32xf32>, vector<32x128xf32>, vector<8x128xf32> -> vector<8x128xf32>
    %c0_65 = arith.constant 0 : index
    %c0_66 = arith.constant 0 : index
    %263 = vector.load %arg5[%c0_65, %c0_66] : memref<8x128xf32, #tpu.memory_space<vmem>>, vector<8x128xf32>
    %264 = arith.addf %262, %263 : vector<8x128xf32>
    %c0_67 = arith.constant 0 : index
    %c0_68 = arith.constant 0 : index
    %265 = vector.load %arg6[%c0_67, %c0_68] : memref<8x128xf32, #tpu.memory_space<vmem>>, vector<8x128xf32>
    tpu.vector_store %arg6[%c0_67, %c0_68], %264 {strides = array<i32>} : memref<8x128xf32, #tpu.memory_space<vmem>>, vector<8x128xf32>,
    return
  }
}

</mosaic_0001>

<llo_original>
// kernel: tpu_custom_call.1
$region0: #{tpu_custom_call.1}
  #allocation0 [shape = 'u32[]', space=smem, size = 0x4, offset = 0x4, fixed_abs, tag = 'smem constant byte address 0x4 - core index']
  #allocation1 [shape = 'u32[72,128]{1,0:T(1,128)}', space=vmem, size = 0x9000, scoped, tag = 'internal scratch']
  %s0 = inlined_call_operand.hbm [shape: f32[8,8,16], index: 0, kind: input, shape index: {}]
  %s1 = inlined_call_operand.hbm [shape: f32[16,128], index: 1, kind: input, shape index: {}]
  %s2 = inlined_call_operand.hbm [shape: f32[32,128], index: 2, kind: input, shape index: {}]
  %s3 = inlined_call_operand.hbm [shape: f32[8,128], index: 3, kind: input, shape index: {}]
  %s4 = inlined_call_operand.hbm [shape: f32[32,128], index: 4, kind: input, shape index: {}]
  %s5 = inlined_call_operand.hbm [shape: f32[8,128], index: 5, kind: input, shape index: {}]
  %s6 = inlined_call_operand.hbm [shape: f32[8,128], index: 6, kind: output, shape index: {}]
  %s7 = sld [smem:[#allocation0]]
  $region58: #{tpu_custom_call.1} parent=0
    _
  %s9 = ssub.s32 1, %s7
  %s10 = scalar_select 0, %s9, %s7
  $region1: #{tpu_custom_call.1} parent=0
    #allocation2 [shape = 'u8[32768]{0}', space=vmem, size = 0x8000, scoped, tag = 'input window, operand 0, single buffered']
    #allocation3 [shape = 's32[1]{0}', space=sflag, size = 0x4, scoped, tag = 'scoped memory for tpu_custom_call.1']
    #allocation4 [shape = 's32[1]{0}', space=sflag, size = 0x4, scoped, tag = 'scoped memory for tpu_custom_call.1']
    #allocation5 [shape = 'u8[8192]{0}', space=vmem, size = 0x2000, scoped, tag = 'input window, operand 1, single buffered']
    #allocation6 [shape = 's32[1]{0}', space=sflag, size = 0x4, scoped, tag = 'scoped memory for tpu_custom_call.1']
    #allocation7 [shape = 'u8[16384]{0}', space=vmem, size = 0x4000, scoped, tag = 'input window, operand 2, single buffered']
    #allocation8 [shape = 'u8[4096]{0}', space=vmem, size = 0x1000, scoped, tag = 'input window, operand 3, single buffered']
    #allocation9 [shape = 's32[1]{0}', space=sflag, size = 0x4, scoped, tag = 'scoped memory for tpu_custom_call.1']
    #allocation10 [shape = 'u8[16384]{0}', space=vmem, size = 0x4000, scoped, tag = 'input window, operand 4, single buffered']
    #allocation11 [shape = 'u8[4096]{0}', space=vmem, size = 0x1000, scoped, tag = 'input window, operand 5, single buffered']
    #allocation12 [shape = 's32[1]{0}', space=sflag, size = 0x4, scoped, tag = 'scoped memory for tpu_custom_call.1']
    #allocation13 [shape = 'u8[4096]{0}', space=vmem, size = 0x1000, scoped, tag = 'output window, operand 0, single buffered']
    %11 = vsyncpa [#allocation3], 0
    %12 = vsyncpa [#allocation6], 0
    %13 = vsyncpa [#allocation9], 0
    %14 = vsyncpa [#allocation12], 0
    %15 = vsyncpa [#allocation4], 0
    // Predicated region
    $region2: #{tpu_custom_call.1} parent=1 // pred_check
      _
    $region3: #{tpu_custom_call.1} parent=1 // pred_check_branch
      %17 = sbr.rel (0) target = $region5
    $region4: #{tpu_custom_call.1} parent=1 // pred_region
      %19 = vsyncadd [#allocation3], 0
      %s20 = sshll.u32 %s0, 4
      %s21 = int_to_ptr.hbm [resolvable:$true] %s20
      %s22 = sshll.u32 [#allocation2], 4
      %s23 = int_to_ptr.vmem [resolvable:$true] %s22
      %28 = dma.hbm_to_vmem [thread:$0]  %s21, 1024, %s23, [#allocation3], 128, 128, 8
    $region5: #{tpu_custom_call.1} parent=1 // pred_fallthru
      _
    // Predicated region
    $region6: #{tpu_custom_call.1} parent=1 // pred_check
      _
    $region7: #{tpu_custom_call.1} parent=1 // pred_check_branch
      %30 = sbr.rel (0) target = $region9
    $region8: #{tpu_custom_call.1} parent=1 // pred_region
      %32 = vsyncadd [#allocation6], 0
      %s33 = sshll.u32 %s1, 4
      %s34 = int_to_ptr.hbm [resolvable:$true] %s33
      %s35 = sshll.u32 [#allocation5], 4
      %s36 = int_to_ptr.vmem [resolvable:$true] %s35
      %41 = dma.hbm_to_vmem [thread:$0]  %s34, 256, %s36, [#allocation6], 128, 128, 8
    $region9: #{tpu_custom_call.1} parent=1 // pred_fallthru
      _
    // Predicated region
    $region10: #{tpu_custom_call.1} parent=1 // pred_check
      _
    $region11: #{tpu_custom_call.1} parent=1 // pred_check_branch
      %43 = sbr.rel (0) target = $region13
    $region12: #{tpu_custom_call.1} parent=1 // pred_region
      %45 = vsyncadd [#allocation6], 0
      %s46 = sshll.u32 %s2, 4
      %s47 = int_to_ptr.hbm [resolvable:$true] %s46
      %s48 = sshll.u32 [#allocation7], 4
      %s49 = int_to_ptr.vmem [resolvable:$true] %s48
      %54 = dma.hbm_to_vmem [thread:$0]  %s47, 512, %s49, [#allocation6], 128, 128, 8
    $region13: #{tpu_custom_call.1} parent=1 // pred_fallthru
      _
    // Predicated region
    $region14: #{tpu_custom_call.1} parent=1 // pred_check
      _
    $region15: #{tpu_custom_call.1} parent=1 // pred_check_branch
      %56 = sbr.rel (0) target = $region17
    $region16: #{tpu_custom_call.1} parent=1 // pred_region
      %58 = vsyncadd [#allocation9], 0
      %s60 = sshll.u32 %s3, 4
      %s61 = int_to_ptr.hbm [resolvable:$true] %s60
      %s62 = sshll.u32 [#allocation8], 4
      %s63 = int_to_ptr.vmem [resolvable:$true] %s62
      %65 = dma.hbm_to_vmem [thread:$0]  %s61, 128, %s63, [#allocation9]
    $region17: #{tpu_custom_call.1} parent=1 // pred_fallthru
      _
    // Predicated region
    $region18: #{tpu_custom_call.1} parent=1 // pred_check
      _
    $region19: #{tpu_custom_call.1} parent=1 // pred_check_branch
      %67 = sbr.rel (0) target = $region21
    $region20: #{tpu_custom_call.1} parent=1 // pred_region
      %69 = vsyncadd [#allocation9], 0
      %s70 = sshll.u32 %s4, 4
      %s71 = int_to_ptr.hbm [resolvable:$true] %s70
      %s72 = sshll.u32 [#allocation10], 4
      %s73 = int_to_ptr.vmem [resolvable:$true] %s72
      %78 = dma.hbm_to_vmem [thread:$0]  %s71, 512, %s73, [#allocation9], 128, 128, 8
    $region21: #{tpu_custom_call.1} parent=1 // pred_fallthru
      _
    // Predicated region
    $region22: #{tpu_custom_call.1} parent=1 // pred_check
      _
    $region23: #{tpu_custom_call.1} parent=1 // pred_check_branch
      %80 = sbr.rel (0) target = $region25
    $region24: #{tpu_custom_call.1} parent=1 // pred_region
      %82 = vsyncadd [#allocation12], 0
      %s84 = sshll.u32 %s5, 4
      %s85 = int_to_ptr.hbm [resolvable:$true] %s84
      %s86 = sshll.u32 [#allocation11], 4
      %s87 = int_to_ptr.vmem [resolvable:$true] %s86
      %89 = dma.hbm_to_vmem [thread:$0]  %s85, 128, %s87, [#allocation12]
    $region25: #{tpu_custom_call.1} parent=1 // pred_fallthru
      _
    // Predicated region
    $region26: #{tpu_custom_call.1} parent=1 // pred_check
      _
    $region27: #{tpu_custom_call.1} parent=1 // pred_check_branch
      %91 = sbr.rel (0) target = $region29
    $region28: #{tpu_custom_call.1} parent=1 // pred_region
      %93 = dma.done [#allocation3], 1024
    $region29: #{tpu_custom_call.1} parent=1 // pred_fallthru
      _
    // Predicated region
    $region30: #{tpu_custom_call.1} parent=1 // pred_check
      _
    $region31: #{tpu_custom_call.1} parent=1 // pred_check_branch
      %95 = sbr.rel (0) target = $region33
    $region32: #{tpu_custom_call.1} parent=1 // pred_region
      %97 = dma.done [#allocation6], 256
    $region33: #{tpu_custom_call.1} parent=1 // pred_fallthru
      _
    // Predicated region
    $region34: #{tpu_custom_call.1} parent=1 // pred_check
      _
    $region35: #{tpu_custom_call.1} parent=1 // pred_check_branch
      %99 = sbr.rel (0) target = $region37
    $region36: #{tpu_custom_call.1} parent=1 // pred_region
      %101 = dma.done [#allocation6], 512
    $region37: #{tpu_custom_call.1} parent=1 // pred_fallthru
      _
    // Predicated region
    $region38: #{tpu_custom_call.1} parent=1 // pred_check
      _
    $region39: #{tpu_custom_call.1} parent=1 // pred_check_branch
      %103 = sbr.rel (0) target = $region41
    $region40: #{tpu_custom_call.1} parent=1 // pred_region
      %105 = dma.done [#allocation9], 128
    $region41: #{tpu_custom_call.1} parent=1 // pred_fallthru
      _
    // Predicated region
    $region42: #{tpu_custom_call.1} parent=1 // pred_check
      _
    $region43: #{tpu_custom_call.1} parent=1 // pred_check_branch
      %107 = sbr.rel (0) target = $region45
    $region44: #{tpu_custom_call.1} parent=1 // pred_region
      %109 = dma.done [#allocation9], 512
    $region45: #{tpu_custom_call.1} parent=1 // pred_fallthru
      _
    // Predicated region
    $region46: #{tpu_custom_call.1} parent=1 // pred_check
      _
    $region47: #{tpu_custom_call.1} parent=1 // pred_check_branch
      %111 = sbr.rel (0) target = $region49
    $region48: #{tpu_custom_call.1} parent=1 // pred_region
      %113 = dma.done [#allocation12], 128
    $region49: #{tpu_custom_call.1} parent=1 // pred_fallthru
      _
    %v114 = vld [vmem:[#allocation5] sm:$0xff]
    %v115 = vld [vmem:[#allocation5 + $0x8] sm:$0xff]
    %v116 = vld [vmem:[#allocation7] sm:$0xff]
    %v117 = vld [vmem:[#allocation7 + $0x8] sm:$0xff]
    %v118 = vld [vmem:[#allocation7 + $0x10] sm:$0xff]
    %v119 = vld [vmem:[#allocation7 + $0x18] sm:$0xff]
    %v120 = vld [vmem:[#allocation8] sm:$0xff]
    %v121 = vld [vmem:[#allocation2] sm:$0xff]
    %vm122 = vcmask 261120
    %v124 = vsel %vm122, 0.0, 0
    %126 = vmatpush.msra.mxu0 0.0
    %127 = vmatpush.msra.mxu0 0.0
    %128 = vmatpush.msra.mxu0 0.0
    %129 = vmatpush.msra.mxu0 0.0
    %130 = vmatpush.msra.mxu0 0.0
    %131 = vmatpush.msra.mxu0 0.0
    %132 = vmatpush.msra.mxu0 0.0
    %133 = vmatpush.msra.mxu0 0.0
    %134 = vmatpush.msra.mxu0 0.0
    %135 = vmatpush.msra.mxu0 0.0
    %136 = vmatpush.msra.mxu0 0.0
    %137 = vmatpush.msra.mxu0 0.0
    %138 = vmatpush.msra.mxu0 %v119
    %139 = vmatpush.msra.mxu0 %v118
    %140 = vmatpush.msra.mxu0 %v117
    %141 = vmatpush.msra.mxu0 %v116
    %142 = vmatmul.f32.gmra.mxu0 %v124
    %v143 = vpop.f32.mrf.mxu0
    %v144 = vadd.f32 0.0, %v143
    %145 = vdwg.mxu0
    %vm146 = vcmask 130048
    %v148 = vsel %vm146, %v121, 0
    %150 = vmatpush.msra.mxu0 0.0
    %151 = vmatpush.msra.mxu0 0.0
    %152 = vmatpush.msra.mxu0 0.0
    %153 = vmatpush.msra.mxu0 0.0
    %154 = vmatpush.msra.mxu0 0.0
    %155 = vmatpush.msra.mxu0 0.0
    %156 = vmatpush.msra.mxu0 0.0
    %157 = vmatpush.msra.mxu0 0.0
    %158 = vmatpush.msra.mxu0 0.0
    %159 = vmatpush.msra.mxu0 0.0
    %160 = vmatpush.msra.mxu0 0.0
    %161 = vmatpush.msra.mxu0 0.0
    %162 = vmatpush.msra.mxu0 0.0
    %163 = vmatpush.msra.mxu0 0.0
    %164 = vmatpush.msra.mxu0 %v115
    %165 = vmatpush.msra.mxu0 %v114
    %166 = vmatmul.f32.gmra.mxu0 %v148
    %v167 = vpop.f32.mrf.mxu0
    %v168 = vadd.f32 %v144, %v167
    %169 = vdwg.mxu0
    %v170 = vadd.f32 %v168, %v120
    %v171 = vxor.u32 %v170, 2147483648
    %v172 = vmul.f32 %v171, 1.442695
    %v173 = vpow.pop %v172
    %v174 = vadd.f32 %v173, 1.0
    %v175 = vrcp.pop %v174
    %v176 = vmul.f32 %v174, %v175
    %v177 = vsub.f32 1.0, %v176
    %v178 = vmul.f32 %v175, %v177
    %v179 = vadd.f32 %v175, %v178
    %vm180 = vweird.f32 %v174
    %vm181 = vweird.f32 %v175
    %vm182 = vmor %vm180, %vm181
    %v183 = vsel %vm182, %v175, %v179
    %v184 = vand.u32 2147483647, %v174
    %vm185 = vcmp.eq.f32.partialorder %v184, 8.507059e+37
    %v186 = vand.u32 %v174, 2147483648
    %v187 = vor.u32 1.1754944e-38, %v186
    %v188 = vsel %vm185, %v187, %v183
    %v189 = vmul.f32 1.0, %v188
    %v190 = vtanh.pop %v170
    %v191 = vmul.f32 %v189, 0.0
    %193 = vrot.lane.b32.xlu0 %v190, 64
    %v194 = vpop.permute.xlu0 %193
    %v196 = vmul.f32 %v189, %v194
    %198 = vrot.lane.b32.xlu0 %v196, 32
    %v199 = vpop.permute.xlu0 %198
    %v201 = vadd.f32 %v191, %v199
    %v202 = vtanh.pop %v201
    %204 = vrot.lane.b32.xlu0 %v202, 64
    %v205 = vpop.permute.xlu0 %204
    %v207 = vmul.f32 %v189, %v205
    %s208 = scalar_lea.vmem [#allocation2], 8
    %v209 = vld [vmem:[%s208] sm:$0xff]
    %211 = vrot.lane.b32.xlu0 %v207, 32
    %v212 = vpop.permute.xlu0 %211
    %v213 = vsel %vm122, %v212, 0
    %215 = vmatpush.msra.mxu0 0.0
    %216 = vmatpush.msra.mxu0 0.0
    %217 = vmatpush.msra.mxu0 0.0
    %218 = vmatpush.msra.mxu0 0.0
    %219 = vmatpush.msra.mxu0 0.0
    %220 = vmatpush.msra.mxu0 0.0
    %221 = vmatpush.msra.mxu0 0.0
    %222 = vmatpush.msra.mxu0 0.0
    %223 = vmatpush.msra.mxu0 0.0
    %224 = vmatpush.msra.mxu0 0.0
    %225 = vmatpush.msra.mxu0 0.0
    %226 = vmatpush.msra.mxu0 0.0
    %227 = vmatpush.msra.mxu0 %v119
    %228 = vmatpush.msra.mxu0 %v118
    %229 = vmatpush.msra.mxu0 %v117
    %230 = vmatpush.msra.mxu0 %v116
    %231 = vmatmul.f32.gmra.mxu0 %v213
    %v232 = vpop.f32.mrf.mxu0
    %v233 = vadd.f32 0.0, %v232
    %234 = vdwg.mxu0
    %v236 = vsel %vm146, %v209, 0
    %238 = vmatpush.msra.mxu0 0.0
    %239 = vmatpush.msra.mxu0 0.0
    %240 = vmatpush.msra.mxu0 0.0
    %241 = vmatpush.msra.mxu0 0.0
    %242 = vmatpush.msra.mxu0 0.0
    %243 = vmatpush.msra.mxu0 0.0
    %244 = vmatpush.msra.mxu0 0.0
    %245 = vmatpush.msra.mxu0 0.0
    %246 = vmatpush.msra.mxu0 0.0
    %247 = vmatpush.msra.mxu0 0.0
    %248 = vmatpush.msra.mxu0 0.0
    %249 = vmatpush.msra.mxu0 0.0
    %250 = vmatpush.msra.mxu0 0.0
    %251 = vmatpush.msra.mxu0 0.0
    %252 = vmatpush.msra.mxu0 %v115
    %253 = vmatpush.msra.mxu0 %v114
    %254 = vmatmul.f32.gmra.mxu0 %v236
    %v255 = vpop.f32.mrf.mxu0
    %v256 = vadd.f32 %v233, %v255
    %257 = vdwg.mxu0
    %v258 = vadd.f32 %v256, %v120
    %v259 = vxor.u32 %v258, 2147483648
    %v260 = vmul.f32 %v259, 1.442695
    %v261 = vpow.pop %v260
    %v262 = vadd.f32 %v261, 1.0
    %v263 = vrcp.pop %v262
    %v264 = vmul.f32 %v262, %v263
    %v265 = vsub.f32 1.0, %v264
    %v266 = vmul.f32 %v263, %v265
    %v267 = vadd.f32 %v263, %v266
    %vm268 = vweird.f32 %v262
    %vm269 = vweird.f32 %v263
    %vm270 = vmor %vm268, %vm269
    %v271 = vsel %vm270, %v263, %v267
    %v272 = vand.u32 2147483647, %v262
    %vm273 = vcmp.eq.f32.partialorder %v272, 8.507059e+37
    %v274 = vand.u32 %v262, 2147483648
    %v275 = vor.u32 1.1754944e-38, %v274
    %v276 = vsel %vm273, %v275, %v271
    %v277 = vmul.f32 1.0, %v276
    %v278 = vtanh.pop %v258
    %v279 = vmul.f32 %v277, %v201
    %281 = vrot.lane.b32.xlu0 %v278, 64
    %v282 = vpop.permute.xlu0 %281
    %v284 = vmul.f32 %v277, %v282
    %286 = vrot.lane.b32.xlu0 %v284, 32
    %v287 = vpop.permute.xlu0 %286
    %v289 = vadd.f32 %v279, %v287
    %v290 = vtanh.pop %v289
    %292 = vrot.lane.b32.xlu0 %v290, 64
    %v293 = vpop.permute.xlu0 %292
    %v295 = vmul.f32 %v277, %v293
    %s296 = scalar_lea.vmem [#allocation2], 16
    %v297 = vld [vmem:[%s296] sm:$0xff]
    %299 = vrot.lane.b32.xlu0 %v295, 32
    %v300 = vpop.permute.xlu0 %299
    %v301 = vsel %vm122, %v300, 0
    %303 = vmatpush.msra.mxu0 0.0
    %304 = vmatpush.msra.mxu0 0.0
    %305 = vmatpush.msra.mxu0 0.0
    %306 = vmatpush.msra.mxu0 0.0
    %307 = vmatpush.msra.mxu0 0.0
    %308 = vmatpush.msra.mxu0 0.0
    %309 = vmatpush.msra.mxu0 0.0
    %310 = vmatpush.msra.mxu0 0.0
    %311 = vmatpush.msra.mxu0 0.0
    %312 = vmatpush.msra.mxu0 0.0
    %313 = vmatpush.msra.mxu0 0.0
    %314 = vmatpush.msra.mxu0 0.0
    %315 = vmatpush.msra.mxu0 %v119
    %316 = vmatpush.msra.mxu0 %v118
    %317 = vmatpush.msra.mxu0 %v117
    %318 = vmatpush.msra.mxu0 %v116
    %319 = vmatmul.f32.gmra.mxu0 %v301
    %v320 = vpop.f32.mrf.mxu0
    %v321 = vadd.f32 0.0, %v320
    %322 = vdwg.mxu0
    %v324 = vsel %vm146, %v297, 0
    %326 = vmatpush.msra.mxu0 0.0
    %327 = vmatpush.msra.mxu0 0.0
    %328 = vmatpush.msra.mxu0 0.0
    %329 = vmatpush.msra.mxu0 0.0
    %330 = vmatpush.msra.mxu0 0.0
    %331 = vmatpush.msra.mxu0 0.0
    %332 = vmatpush.msra.mxu0 0.0
    %333 = vmatpush.msra.mxu0 0.0
    %334 = vmatpush.msra.mxu0 0.0
    %335 = vmatpush.msra.mxu0 0.0
    %336 = vmatpush.msra.mxu0 0.0
    %337 = vmatpush.msra.mxu0 0.0
    %338 = vmatpush.msra.mxu0 0.0
    %339 = vmatpush.msra.mxu0 0.0
    %340 = vmatpush.msra.mxu0 %v115
    %341 = vmatpush.msra.mxu0 %v114
    %342 = vmatmul.f32.gmra.mxu0 %v324
    %v343 = vpop.f32.mrf.mxu0
    %v344 = vadd.f32 %v321, %v343
    %345 = vdwg.mxu0
    %v346 = vadd.f32 %v344, %v120
    %v347 = vxor.u32 %v346, 2147483648
    %v348 = vmul.f32 %v347, 1.442695
    %v349 = vpow.pop %v348
    %v350 = vadd.f32 %v349, 1.0
    %v351 = vrcp.pop %v350
    %v352 = vmul.f32 %v350, %v351
    %v353 = vsub.f32 1.0, %v352
    %v354 = vmul.f32 %v351, %v353
    %v355 = vadd.f32 %v351, %v354
    %vm356 = vweird.f32 %v350
    %vm357 = vweird.f32 %v351
    %vm358 = vmor %vm356, %vm357
    %v359 = vsel %vm358, %v351, %v355
    %v360 = vand.u32 2147483647, %v350
    %vm361 = vcmp.eq.f32.partialorder %v360, 8.507059e+37
    %v362 = vand.u32 %v350, 2147483648
    %v363 = vor.u32 1.1754944e-38, %v362
    %v364 = vsel %vm361, %v363, %v359
    %v365 = vmul.f32 1.0, %v364
    %v366 = vtanh.pop %v346
    %v367 = vmul.f32 %v365, %v289
    %369 = vrot.lane.b32.xlu0 %v366, 64
    %v370 = vpop.permute.xlu0 %369
    %v372 = vmul.f32 %v365, %v370
    %374 = vrot.lane.b32.xlu0 %v372, 32
    %v375 = vpop.permute.xlu0 %374
    %v377 = vadd.f32 %v367, %v375
    %v378 = vtanh.pop %v377
    %380 = vrot.lane.b32.xlu0 %v378, 64
    %v381 = vpop.permute.xlu0 %380
    %v383 = vmul.f32 %v365, %v381
    %s384 = scalar_lea.vmem [#allocation2], 24
    %v385 = vld [vmem:[%s384] sm:$0xff]
    %387 = vrot.lane.b32.xlu0 %v383, 32
    %v388 = vpop.permute.xlu0 %387
    %v389 = vsel %vm122, %v388, 0
    %391 = vmatpush.msra.mxu0 0.0
    %392 = vmatpush.msra.mxu0 0.0
    %393 = vmatpush.msra.mxu0 0.0
    %394 = vmatpush.msra.mxu0 0.0
    %395 = vmatpush.msra.mxu0 0.0
    %396 = vmatpush.msra.mxu0 0.0
    %397 = vmatpush.msra.mxu0 0.0
    %398 = vmatpush.msra.mxu0 0.0
    %399 = vmatpush.msra.mxu0 0.0
    %400 = vmatpush.msra.mxu0 0.0
    %401 = vmatpush.msra.mxu0 0.0
    %402 = vmatpush.msra.mxu0 0.0
    %403 = vmatpush.msra.mxu0 %v119
    %404 = vmatpush.msra.mxu0 %v118
    %405 = vmatpush.msra.mxu0 %v117
    %406 = vmatpush.msra.mxu0 %v116
    %407 = vmatmul.f32.gmra.mxu0 %v389
    %v408 = vpop.f32.mrf.mxu0
    %v409 = vadd.f32 0.0, %v408
    %410 = vdwg.mxu0
    %v412 = vsel %vm146, %v385, 0
    %414 = vmatpush.msra.mxu0 0.0
    %415 = vmatpush.msra.mxu0 0.0
    %416 = vmatpush.msra.mxu0 0.0
    %417 = vmatpush.msra.mxu0 0.0
    %418 = vmatpush.msra.mxu0 0.0
    %419 = vmatpush.msra.mxu0 0.0
    %420 = vmatpush.msra.mxu0 0.0
    %421 = vmatpush.msra.mxu0 0.0
    %422 = vmatpush.msra.mxu0 0.0
    %423 = vmatpush.msra.mxu0 0.0
    %424 = vmatpush.msra.mxu0 0.0
    %425 = vmatpush.msra.mxu0 0.0
    %426 = vmatpush.msra.mxu0 0.0
    %427 = vmatpush.msra.mxu0 0.0
    %428 = vmatpush.msra.mxu0 %v115
    %429 = vmatpush.msra.mxu0 %v114
    %430 = vmatmul.f32.gmra.mxu0 %v412
    %v431 = vpop.f32.mrf.mxu0
    %v432 = vadd.f32 %v409, %v431
    %433 = vdwg.mxu0
    %v434 = vadd.f32 %v432, %v120
    %v435 = vxor.u32 %v434, 2147483648
    %v436 = vmul.f32 %v435, 1.442695
    %v437 = vpow.pop %v436
    %v438 = vadd.f32 %v437, 1.0
    %v439 = vrcp.pop %v438
    %v440 = vmul.f32 %v438, %v439
    %v441 = vsub.f32 1.0, %v440
    %v442 = vmul.f32 %v439, %v441
    %v443 = vadd.f32 %v439, %v442
    %vm444 = vweird.f32 %v438
    %vm445 = vweird.f32 %v439
    %vm446 = vmor %vm444, %vm445
    %v447 = vsel %vm446, %v439, %v443
    %v448 = vand.u32 2147483647, %v438
    %vm449 = vcmp.eq.f32.partialorder %v448, 8.507059e+37
    %v450 = vand.u32 %v438, 2147483648
    %v451 = vor.u32 1.1754944e-38, %v450
    %v452 = vsel %vm449, %v451, %v447
    %v453 = vmul.f32 1.0, %v452
    %v454 = vtanh.pop %v434
    %v455 = vmul.f32 %v453, %v377
    %457 = vrot.lane.b32.xlu0 %v454, 64
    %v458 = vpop.permute.xlu0 %457
    %v460 = vmul.f32 %v453, %v458
    %462 = vrot.lane.b32.xlu0 %v460, 32
    %v463 = vpop.permute.xlu0 %462
    %v465 = vadd.f32 %v455, %v463
    %v466 = vtanh.pop %v465
    %468 = vrot.lane.b32.xlu0 %v466, 64
    %v469 = vpop.permute.xlu0 %468
    %v471 = vmul.f32 %v453, %v469
    %s472 = scalar_lea.vmem [#allocation2], 32
    %v473 = vld [vmem:[%s472] sm:$0xff]
    %475 = vrot.lane.b32.xlu0 %v471, 32
    %v476 = vpop.permute.xlu0 %475
    %v477 = vsel %vm122, %v476, 0
    %479 = vmatpush.msra.mxu0 0.0
    %480 = vmatpush.msra.mxu0 0.0
    %481 = vmatpush.msra.mxu0 0.0
    %482 = vmatpush.msra.mxu0 0.0
    %483 = vmatpush.msra.mxu0 0.0
    %484 = vmatpush.msra.mxu0 0.0
    %485 = vmatpush.msra.mxu0 0.0
    %486 = vmatpush.msra.mxu0 0.0
    %487 = vmatpush.msra.mxu0 0.0
    %488 = vmatpush.msra.mxu0 0.0
    %489 = vmatpush.msra.mxu0 0.0
    %490 = vmatpush.msra.mxu0 0.0
    %491 = vmatpush.msra.mxu0 %v119
    %492 = vmatpush.msra.mxu0 %v118
    %493 = vmatpush.msra.mxu0 %v117
    %494 = vmatpush.msra.mxu0 %v116
    %495 = vmatmul.f32.gmra.mxu0 %v477
    %v496 = vpop.f32.mrf.mxu0
    %v497 = vadd.f32 0.0, %v496
    %498 = vdwg.mxu0
    %v500 = vsel %vm146, %v473, 0
    %502 = vmatpush.msra.mxu0 0.0
    %503 = vmatpush.msra.mxu0 0.0
    %504 = vmatpush.msra.mxu0 0.0
    %505 = vmatpush.msra.mxu0 0.0
    %506 = vmatpush.msra.mxu0 0.0
    %507 = vmatpush.msra.mxu0 0.0
    %508 = vmatpush.msra.mxu0 0.0
    %509 = vmatpush.msra.mxu0 0.0
    %510 = vmatpush.msra.mxu0 0.0
    %511 = vmatpush.msra.mxu0 0.0
    %512 = vmatpush.msra.mxu0 0.0
    %513 = vmatpush.msra.mxu0 0.0
    %514 = vmatpush.msra.mxu0 0.0
    %515 = vmatpush.msra.mxu0 0.0
    %516 = vmatpush.msra.mxu0 %v115
    %517 = vmatpush.msra.mxu0 %v114
    %518 = vmatmul.f32.gmra.mxu0 %v500
    %v519 = vpop.f32.mrf.mxu0
    %v520 = vadd.f32 %v497, %v519
    %521 = vdwg.mxu0
    %v522 = vadd.f32 %v520, %v120
    %v523 = vxor.u32 %v522, 2147483648
    %v524 = vmul.f32 %v523, 1.442695
    %v525 = vpow.pop %v524
    %v526 = vadd.f32 %v525, 1.0
    %v527 = vrcp.pop %v526
    %v528 = vmul.f32 %v526, %v527
    %v529 = vsub.f32 1.0, %v528
    %v530 = vmul.f32 %v527, %v529
    %v531 = vadd.f32 %v527, %v530
    %vm532 = vweird.f32 %v526
    %vm533 = vweird.f32 %v527
    %vm534 = vmor %vm532, %vm533
    %v535 = vsel %vm534, %v527, %v531
    %v536 = vand.u32 2147483647, %v526
    %vm537 = vcmp.eq.f32.partialorder %v536, 8.507059e+37
    %v538 = vand.u32 %v526, 2147483648
    %v539 = vor.u32 1.1754944e-38, %v538
    %v540 = vsel %vm537, %v539, %v535
    %v541 = vmul.f32 1.0, %v540
    %v542 = vtanh.pop %v522
    %v543 = vmul.f32 %v541, %v465
    %545 = vrot.lane.b32.xlu0 %v542, 64
    %v546 = vpop.permute.xlu0 %545
    %v548 = vmul.f32 %v541, %v546
    %550 = vrot.lane.b32.xlu0 %v548, 32
    %v551 = vpop.permute.xlu0 %550
    %v553 = vadd.f32 %v543, %v551
    %v554 = vtanh.pop %v553
    %556 = vrot.lane.b32.xlu0 %v554, 64
    %v557 = vpop.permute.xlu0 %556
    %v559 = vmul.f32 %v541, %v557
    %s560 = scalar_lea.vmem [#allocation2], 40
    %v561 = vld [vmem:[%s560] sm:$0xff]
    %563 = vrot.lane.b32.xlu0 %v559, 32
    %v564 = vpop.permute.xlu0 %563
    %v565 = vsel %vm122, %v564, 0
    %567 = vmatpush.msra.mxu0 0.0
    %568 = vmatpush.msra.mxu0 0.0
    %569 = vmatpush.msra.mxu0 0.0
    %570 = vmatpush.msra.mxu0 0.0
    %571 = vmatpush.msra.mxu0 0.0
    %572 = vmatpush.msra.mxu0 0.0
    %573 = vmatpush.msra.mxu0 0.0
    %574 = vmatpush.msra.mxu0 0.0
    %575 = vmatpush.msra.mxu0 0.0
    %576 = vmatpush.msra.mxu0 0.0
    %577 = vmatpush.msra.mxu0 0.0
    %578 = vmatpush.msra.mxu0 0.0
    %579 = vmatpush.msra.mxu0 %v119
    %580 = vmatpush.msra.mxu0 %v118
    %581 = vmatpush.msra.mxu0 %v117
    %582 = vmatpush.msra.mxu0 %v116
    %583 = vmatmul.f32.gmra.mxu0 %v565
    %v584 = vpop.f32.mrf.mxu0
    %v585 = vadd.f32 0.0, %v584
    %586 = vdwg.mxu0
    %v588 = vsel %vm146, %v561, 0
    %590 = vmatpush.msra.mxu0 0.0
    %591 = vmatpush.msra.mxu0 0.0
    %592 = vmatpush.msra.mxu0 0.0
    %593 = vmatpush.msra.mxu0 0.0
    %594 = vmatpush.msra.mxu0 0.0
    %595 = vmatpush.msra.mxu0 0.0
    %596 = vmatpush.msra.mxu0 0.0
    %597 = vmatpush.msra.mxu0 0.0
    %598 = vmatpush.msra.mxu0 0.0
    %599 = vmatpush.msra.mxu0 0.0
    %600 = vmatpush.msra.mxu0 0.0
    %601 = vmatpush.msra.mxu0 0.0
    %602 = vmatpush.msra.mxu0 0.0
    %603 = vmatpush.msra.mxu0 0.0
    %604 = vmatpush.msra.mxu0 %v115
    %605 = vmatpush.msra.mxu0 %v114
    %606 = vmatmul.f32.gmra.mxu0 %v588
    %v607 = vpop.f32.mrf.mxu0
    %v608 = vadd.f32 %v585, %v607
    %609 = vdwg.mxu0
    %v610 = vadd.f32 %v608, %v120
    %v611 = vxor.u32 %v610, 2147483648
    %v612 = vmul.f32 %v611, 1.442695
    %v613 = vpow.pop %v612
    %v614 = vadd.f32 %v613, 1.0
    %v615 = vrcp.pop %v614
    %v616 = vmul.f32 %v614, %v615
    %v617 = vsub.f32 1.0, %v616
    %v618 = vmul.f32 %v615, %v617
    %v619 = vadd.f32 %v615, %v618
    %vm620 = vweird.f32 %v614
    %vm621 = vweird.f32 %v615
    %vm622 = vmor %vm620, %vm621
    %v623 = vsel %vm622, %v615, %v619
    %v624 = vand.u32 2147483647, %v614
    %vm625 = vcmp.eq.f32.partialorder %v624, 8.507059e+37
    %v626 = vand.u32 %v614, 2147483648
    %v627 = vor.u32 1.1754944e-38, %v626
    %v628 = vsel %vm625, %v627, %v623
    %v629 = vmul.f32 1.0, %v628
    %v630 = vtanh.pop %v610
    %v631 = vmul.f32 %v629, %v553
    %633 = vrot.lane.b32.xlu0 %v630, 64
    %v634 = vpop.permute.xlu0 %633
    %v636 = vmul.f32 %v629, %v634
    %638 = vrot.lane.b32.xlu0 %v636, 32
    %v639 = vpop.permute.xlu0 %638
    %v641 = vadd.f32 %v631, %v639
    %v642 = vtanh.pop %v641
    %644 = vrot.lane.b32.xlu0 %v642, 64
    %v645 = vpop.permute.xlu0 %644
    %v647 = vmul.f32 %v629, %v645
    %s648 = scalar_lea.vmem [#allocation2], 48
    %v649 = vld [vmem:[%s648] sm:$0xff]
    %651 = vrot.lane.b32.xlu0 %v647, 32
    %v652 = vpop.permute.xlu0 %651
    %v653 = vsel %vm122, %v652, 0
    %655 = vmatpush.msra.mxu0 0.0
    %656 = vmatpush.msra.mxu0 0.0
    %657 = vmatpush.msra.mxu0 0.0
    %658 = vmatpush.msra.mxu0 0.0
    %659 = vmatpush.msra.mxu0 0.0
    %660 = vmatpush.msra.mxu0 0.0
    %661 = vmatpush.msra.mxu0 0.0
    %662 = vmatpush.msra.mxu0 0.0
    %663 = vmatpush.msra.mxu0 0.0
    %664 = vmatpush.msra.mxu0 0.0
    %665 = vmatpush.msra.mxu0 0.0
    %666 = vmatpush.msra.mxu0 0.0
    %667 = vmatpush.msra.mxu0 %v119
    %668 = vmatpush.msra.mxu0 %v118
    %669 = vmatpush.msra.mxu0 %v117
    %670 = vmatpush.msra.mxu0 %v116
    %671 = vmatmul.f32.gmra.mxu0 %v653
    %v672 = vpop.f32.mrf.mxu0
    %v673 = vadd.f32 0.0, %v672
    %674 = vdwg.mxu0
    %v676 = vsel %vm146, %v649, 0
    %678 = vmatpush.msra.mxu0 0.0
    %679 = vmatpush.msra.mxu0 0.0
    %680 = vmatpush.msra.mxu0 0.0
    %681 = vmatpush.msra.mxu0 0.0
    %682 = vmatpush.msra.mxu0 0.0
    %683 = vmatpush.msra.mxu0 0.0
    %684 = vmatpush.msra.mxu0 0.0
    %685 = vmatpush.msra.mxu0 0.0
    %686 = vmatpush.msra.mxu0 0.0
    %687 = vmatpush.msra.mxu0 0.0
    %688 = vmatpush.msra.mxu0 0.0
    %689 = vmatpush.msra.mxu0 0.0
    %690 = vmatpush.msra.mxu0 0.0
    %691 = vmatpush.msra.mxu0 0.0
    %692 = vmatpush.msra.mxu0 %v115
    %693 = vmatpush.msra.mxu0 %v114
    %694 = vmatmul.f32.gmra.mxu0 %v676
    %v695 = vpop.f32.mrf.mxu0
    %v696 = vadd.f32 %v673, %v695
    %697 = vdwg.mxu0
    %v698 = vadd.f32 %v696, %v120
    %v699 = vxor.u32 %v698, 2147483648
    %v700 = vmul.f32 %v699, 1.442695
    %v701 = vpow.pop %v700
    %v702 = vadd.f32 %v701, 1.0
    %v703 = vrcp.pop %v702
    %v704 = vmul.f32 %v702, %v703
    %v705 = vsub.f32 1.0, %v704
    %v706 = vmul.f32 %v703, %v705
    %v707 = vadd.f32 %v703, %v706
    %vm708 = vweird.f32 %v702
    %vm709 = vweird.f32 %v703
    %vm710 = vmor %vm708, %vm709
    %v711 = vsel %vm710, %v703, %v707
    %v712 = vand.u32 2147483647, %v702
    %vm713 = vcmp.eq.f32.partialorder %v712, 8.507059e+37
    %v714 = vand.u32 %v702, 2147483648
    %v715 = vor.u32 1.1754944e-38, %v714
    %v716 = vsel %vm713, %v715, %v711
    %v717 = vmul.f32 1.0, %v716
    %v718 = vtanh.pop %v698
    %v719 = vmul.f32 %v717, %v641
    %721 = vrot.lane.b32.xlu0 %v718, 64
    %v722 = vpop.permute.xlu0 %721
    %v724 = vmul.f32 %v717, %v722
    %726 = vrot.lane.b32.xlu0 %v724, 32
    %v727 = vpop.permute.xlu0 %726
    %v729 = vadd.f32 %v719, %v727
    %v730 = vtanh.pop %v729
    %732 = vrot.lane.b32.xlu0 %v730, 64
    %v733 = vpop.permute.xlu0 %732
    %v735 = vmul.f32 %v717, %v733
    %s736 = scalar_lea.vmem [#allocation2], 56
    %v737 = vld [vmem:[%s736] sm:$0xff]
    %739 = vrot.lane.b32.xlu0 %v735, 32
    %v740 = vpop.permute.xlu0 %739
    %v741 = vsel %vm122, %v740, 0
    %743 = vmatpush.msra.mxu0 0.0
    %744 = vmatpush.msra.mxu0 0.0
    %745 = vmatpush.msra.mxu0 0.0
    %746 = vmatpush.msra.mxu0 0.0
    %747 = vmatpush.msra.mxu0 0.0
    %748 = vmatpush.msra.mxu0 0.0
    %749 = vmatpush.msra.mxu0 0.0
    %750 = vmatpush.msra.mxu0 0.0
    %751 = vmatpush.msra.mxu0 0.0
    %752 = vmatpush.msra.mxu0 0.0
    %753 = vmatpush.msra.mxu0 0.0
    %754 = vmatpush.msra.mxu0 0.0
    %755 = vmatpush.msra.mxu0 %v119
    %756 = vmatpush.msra.mxu0 %v118
    %757 = vmatpush.msra.mxu0 %v117
    %758 = vmatpush.msra.mxu0 %v116
    %759 = vmatmul.f32.gmra.mxu0 %v741
    %v760 = vpop.f32.mrf.mxu0
    %v761 = vadd.f32 0.0, %v760
    %762 = vdwg.mxu0
    %v764 = vsel %vm146, %v737, 0
    %766 = vmatpush.msra.mxu0 0.0
    %767 = vmatpush.msra.mxu0 0.0
    %768 = vmatpush.msra.mxu0 0.0
    %769 = vmatpush.msra.mxu0 0.0
    %770 = vmatpush.msra.mxu0 0.0
    %771 = vmatpush.msra.mxu0 0.0
    %772 = vmatpush.msra.mxu0 0.0
    %773 = vmatpush.msra.mxu0 0.0
    %774 = vmatpush.msra.mxu0 0.0
    %775 = vmatpush.msra.mxu0 0.0
    %776 = vmatpush.msra.mxu0 0.0
    %777 = vmatpush.msra.mxu0 0.0
    %778 = vmatpush.msra.mxu0 0.0
    %779 = vmatpush.msra.mxu0 0.0
    %780 = vmatpush.msra.mxu0 %v115
    %781 = vmatpush.msra.mxu0 %v114
    %782 = vmatmul.f32.gmra.mxu0 %v764
    %v783 = vpop.f32.mrf.mxu0
    %v784 = vadd.f32 %v761, %v783
    %785 = vdwg.mxu0
    %v786 = vadd.f32 %v784, %v120
    %v787 = vxor.u32 %v786, 2147483648
    %v788 = vmul.f32 %v787, 1.442695
    %v789 = vpow.pop %v788
    %v790 = vadd.f32 %v789, 1.0
    %v791 = vrcp.pop %v790
    %v792 = vmul.f32 %v790, %v791
    %v793 = vsub.f32 1.0, %v792
    %v794 = vmul.f32 %v791, %v793
    %v795 = vadd.f32 %v791, %v794
    %vm796 = vweird.f32 %v790
    %vm797 = vweird.f32 %v791
    %vm798 = vmor %vm796, %vm797
    %v799 = vsel %vm798, %v791, %v795
    %v800 = vand.u32 2147483647, %v790
    %vm801 = vcmp.eq.f32.partialorder %v800, 8.507059e+37
    %v802 = vand.u32 %v790, 2147483648
    %v803 = vor.u32 1.1754944e-38, %v802
    %v804 = vsel %vm801, %v803, %v799
    %v805 = vmul.f32 1.0, %v804
    %v806 = vtanh.pop %v786
    %v807 = vmul.f32 %v805, %v729
    %809 = vrot.lane.b32.xlu0 %v806, 64
    %v810 = vpop.permute.xlu0 %809
    %v812 = vmul.f32 %v805, %v810
    %814 = vrot.lane.b32.xlu0 %v812, 32
    %v815 = vpop.permute.xlu0 %814
    %v817 = vadd.f32 %v807, %v815
    %v818 = vtanh.pop %v817
    %820 = vrot.lane.b32.xlu0 %v818, 64
    %v821 = vpop.permute.xlu0 %820
    %v823 = vmul.f32 %v805, %v821
    %v824 = vld [vmem:[#allocation10] sm:$0xff]
    %v825 = vld [vmem:[#allocation10 + $0x8] sm:$0xff]
    %v826 = vld [vmem:[#allocation10 + $0x10] sm:$0xff]
    %v827 = vld [vmem:[#allocation10 + $0x18] sm:$0xff]
    %v828 = vld [vmem:[#allocation11] sm:$0xff]
    %830 = vrot.lane.b32.xlu0 %v823, 32
    %v831 = vpop.permute.xlu0 %830
    %v832 = vsel %vm122, %v831, 0
    %834 = vmatpush.msra.mxu0 0.0
    %835 = vmatpush.msra.mxu0 0.0
    %836 = vmatpush.msra.mxu0 0.0
    %837 = vmatpush.msra.mxu0 0.0
    %838 = vmatpush.msra.mxu0 0.0
    %839 = vmatpush.msra.mxu0 0.0
    %840 = vmatpush.msra.mxu0 0.0
    %841 = vmatpush.msra.mxu0 0.0
    %842 = vmatpush.msra.mxu0 0.0
    %843 = vmatpush.msra.mxu0 0.0
    %844 = vmatpush.msra.mxu0 0.0
    %845 = vmatpush.msra.mxu0 0.0
    %846 = vmatpush.msra.mxu0 %v827
    %847 = vmatpush.msra.mxu0 %v826
    %848 = vmatpush.msra.mxu0 %v825
    %849 = vmatpush.msra.mxu0 %v824
    %850 = vmatmul.f32.gmra.mxu0 %v832
    %v851 = vpop.f32.mrf.mxu0
    %v852 = vadd.f32 %v828, %v851
    %853 = vdwg.mxu0
    %854 = vst [vmem:[#allocation13] sm:$0xff] %v852
    // Predicated region
    $region50: #{tpu_custom_call.1} parent=1 // pred_check
      _
    $region51: #{tpu_custom_call.1} parent=1 // pred_check_branch
      %856 = sbr.rel (0) target = $region53
    $region52: #{tpu_custom_call.1} parent=1 // pred_region
      %858 = vsyncadd [#allocation4], 0
      %s860 = sshll.u32 [#allocation13], 4
      %s861 = int_to_ptr.vmem [resolvable:$true] %s860
      %s862 = sshll.u32 %s6, 4
      %s863 = int_to_ptr.hbm [resolvable:$true] %s862
      %865 = dma.vmem_to_hbm [thread:$0]  %s861, 128, %s863, [#allocation4]
    $region53: #{tpu_custom_call.1} parent=1 // pred_fallthru
      _
    // Predicated region
    $region54: #{tpu_custom_call.1} parent=1 // pred_check
      _
    $region55: #{tpu_custom_call.1} parent=1 // pred_check_branch
      %867 = sbr.rel (0) target = $region57
    $region56: #{tpu_custom_call.1} parent=1 // pred_region
      %869 = dma.done [#allocation4], 128
    $region57: #{tpu_custom_call.1} parent=1 // pred_fallthru
      _
    %870 = vsyncpa [#allocation3], 1
    %871 = vsyncpa [#allocation6], 1
    %872 = vsyncpa [#allocation9], 1
    %873 = vsyncpa [#allocation12], 1
    %874 = vsyncpa [#allocation4], 1

</llo_original>
